<compile_context>
chip_gen: v5e
topology: v5e:2x2
jax: 0.10.0
libtpu: 0.0.40
codegen_flags: <defaults>
</compile_context>

<pallas_src>
import functools

import jax
import jax.numpy as jnp
from jax.experimental import pallas as pl
from jax.experimental.pallas import tpu as pltpu


_LANE = 128
_DEFAULT_BLOCK_BYTES = 4 * 1024 * 1024     # ~4 MiB HW tiles (v6e/v7x sweet spot)
_VMEM_LIMIT_BYTES = 32 * 1024 * 1024       # raise v5e's 16 MiB scoped default
_DEFAULT_FUSE_BYTES = 2 * 1024 * 1024      # fuse when per-batch slab <= 2 MiB


# --------------------------- fused single-pass ------------------------------

def _fused_kernel(x_ref, w1_ref, b1_ref, w2_ref, b2_ref, o_ref, *, inv_hw):
    """Pool + excite + gate for one batch element in a single VMEM-resident pass.

    x_ref/o_ref: (1, C, HW);  w1/w2: (C, Cr);  b1: (1, Cr);  b2: (C, 1).
    The tiny fc layers use broadcast-mul + axis reductions (VPU/XLU only);
    the MXU would be pure pipeline-fill latency at M=1.
    """
    x = x_ref[0]                                                   # (C, HW)
    pooled = jnp.sum(x.astype(jnp.float32), axis=-1,
                     keepdims=True) * inv_hw                       # (C, 1)
    w1 = w1_ref[...].astype(jnp.float32)
    b1 = b1_ref[...].astype(jnp.float32)
    w2 = w2_ref[...].astype(jnp.float32)
    b2 = b2_ref[...].astype(jnp.float32)
    # fc1: h[r] = sum_c w1[c, r] * pooled[c]   (VPU mul + sublane reduce)
    h = jnp.maximum(jnp.sum(w1 * pooled, axis=0, keepdims=True) + b1, 0.0)
    # fc2: s[c] = sum_r w2[c, r] * h[r]        (VPU mul + lane reduce)
    s = jax.nn.sigmoid(jnp.sum(w2 * h, axis=1, keepdims=True) + b2)  # (C, 1)
    o_ref[0] = x * s.astype(o_ref.dtype)


# --------------------------- two-pass path -----------------------------------

def _pool_kernel(x_ref, psum_ref, *, t_size, hw, n_inner, needs_mask):
    """Partial spatial sums over HW tiles.

    x_ref:    (1, C, T) input tile.
    psum_ref: (1, 1, C, 1) f32 partial-sum accumulator for this (batch, chunk).
    Tail / overflow tiles are masked by global lane index so non-128-multiple
    HW and clamped index maps contribute exactly the valid elements.
    """
    chunk = pl.program_id(1)
    inner = pl.program_id(2)

    xt = x_ref[0].astype(jnp.float32)                              # (C, T)
    if needs_mask:
        t_lin = chunk * n_inner + inner
        lane = jax.lax.broadcasted_iota(jnp.int32, xt.shape, 1)
        xt = jnp.where(t_lin * t_size + lane < hw, xt, 0.0)
    part = jnp.sum(xt, axis=-1, keepdims=True)                     # (C, 1)

    @pl.when(inner == 0)
    def _store_first():                                            # no RMW init
        psum_ref[0, 0] = part

    @pl.when(inner > 0)
    def _accumulate():
        psum_ref[0, 0] += part


def _gate_kernel(scale_ref, x_ref, o_ref):
    # scale_ref: (1, C, 1) f32;  x_ref / o_ref: (1, C, T).
    # Lane-dense broadcast multiply in the input dtype; no extra elementwise
    # work (keeps v5e's non-bf16 VPU path minimal).
    o_ref[0] = x_ref[0] * scale_ref[0].astype(o_ref.dtype)


def _pick_hw_tile(hw, c, itemsize, target_bytes):
    """Largest 128-multiple tile with ~target bytes; full HW if it all fits."""
    t = max(_LANE, (target_bytes // max(1, c * itemsize)) // _LANE * _LANE)
    return hw if t >= hw else t


# --------------------------- public entry point ------------------------------

def ca_module(x_nchw, fc1_w, fc1_b, fc2_w, fc2_b, *,
              fuse_threshold_bytes=_DEFAULT_FUSE_BYTES,
              target_block_bytes=_DEFAULT_BLOCK_BYTES):
    """Channel attention forward.

    x_nchw: (B, C, H, W).  PyTorch conv-style weights:
      fc1_w (Cr, C), fc1_b (Cr,), fc2_w (C, Cr), fc2_b (C,).
    Returns (B, C, H, W).
    """
    B, C, H, W = x_nchw.shape
    HW = H * W
    Cr = fc1_w.shape[0]
    itemsize = x_nchw.dtype.itemsize

    x = x_nchw.reshape(B, C, HW)              # free view, no HBM transpose
    slab_bytes = C * HW * itemsize
    w_bytes = (2 * C * Cr + Cr + C) * 4

    # ---------- fused single pass: 2x HBM traffic instead of 3x ----------
    if slab_bytes <= fuse_threshold_bytes:
        # Tiny one-time weight re-layouts (negligible next to the x stream).
        # TODO(synk): b1/b2 could live in SMEM to avoid 1-lane VMEM tiles (minor).
        w1 = jnp.transpose(fc1_w)             # (C, Cr)
        b1 = fc1_b.reshape(1, Cr)
        w2 = fc2_w.reshape(C, Cr)
        b2 = fc2_b.reshape(C, 1)

        out = pl.pallas_call(
            functools.partial(_fused_kernel, inv_hw=1.0 / HW),
            out_shape=jax.ShapeDtypeStruct((B, C, HW), x.dtype),
            grid=(B,),
            in_specs=[
                pl.BlockSpec((1, C, HW), lambda b: (b, 0, 0)),
                pl.BlockSpec((C, Cr), lambda b: (0, 0)),
                pl.BlockSpec((1, Cr), lambda b: (0, 0)),
                pl.BlockSpec((C, Cr), lambda b: (0, 0)),
                pl.BlockSpec((C, 1), lambda b: (0, 0)),
            ],
            out_specs=pl.BlockSpec((1, C, HW), lambda b: (b, 0, 0)),
            compiler_params=pltpu.CompilerParams(
                dimension_semantics=("parallel",)),
            cost_estimate=pl.CostEstimate(
                flops=int(2 * B * C * HW + 4 * B * C * Cr),
                transcendentals=int(B * C),
                bytes_accessed=int(2 * B * C * HW * itemsize + B * w_bytes)),
        )(x, w1, b1, w2, b2)
        return out.reshape(B, C, H, W)

    # ---------- two-pass path for large spatial maps ----------
    T = _pick_hw_tile(HW, C, itemsize, target_block_bytes)
    n_t = pl.cdiv(HW, T)
    n_chunks = 2 if n_t >= 2 else 1           # >=2-way parallel HW work for v7x
    n_inner = pl.cdiv(n_t, n_chunks)
    needs_mask = (HW % T != 0) or (n_chunks * n_inner != n_t)

    # Pass 1: partial spatial sums (B, n_chunks, C, 1).
    psum = pl.pallas_call(
        functools.partial(_pool_kernel, t_size=T, hw=HW,
                          n_inner=n_inner, needs_mask=needs_mask),
        out_shape=jax.ShapeDtypeStruct((B, n_chunks, C, 1), jnp.float32),
        grid=(B, n_chunks, n_inner),
        in_specs=[
            pl.BlockSpec(
                (1, C, T),
                lambda b, c, i: (b, 0, jnp.minimum(c * n_inner + i, n_t - 1))),
        ],
        out_specs=pl.BlockSpec((1, 1, C, 1), lambda b, c, i: (b, c, 0, 0)),
        compiler_params=pltpu.CompilerParams(
            dimension_semantics=("parallel", "parallel", "arbitrary"),
            vmem_limit_bytes=_VMEM_LIMIT_BYTES),
        cost_estimate=pl.CostEstimate(
            flops=int(B * C * HW),
            transcendentals=0,
            bytes_accessed=int(B * C * HW * itemsize + B * n_chunks * C * 4)),
    )(x)

    # Tiny combine + excite in plain JAX (f32): a few K flops, not kernel-worthy.
    pooled = jnp.sum(psum[..., 0], axis=1) * (1.0 / HW)               # (B, C)
    h = jnp.maximum(pooled @ fc1_w.astype(jnp.float32).T
                    + fc1_b.astype(jnp.float32), 0.0)                 # (B, Cr)
    s = jax.nn.sigmoid(h @ fc2_w.astype(jnp.float32).T
                       + fc2_b.astype(jnp.float32))                   # (B, C)
    scale = s[:, :, None]                                             # (B, C, 1)

    # Pass 2: channel-wise gating, fully parallel grid (megacore-friendly).
    out = pl.pallas_call(
        _gate_kernel,
        out_shape=jax.ShapeDtypeStruct((B, C, HW), x.dtype),
        grid=(B, n_t),
        in_specs=[
            pl.BlockSpec((1, C, 1), lambda b, t: (b, 0, 0)),
            pl.BlockSpec((1, C, T), lambda b, t: (b, 0, t)),
        ],
        out_specs=pl.BlockSpec((1, C, T), lambda b, t: (b, 0, t)),
        compiler_params=pltpu.CompilerParams(
            dimension_semantics=("parallel", "parallel"),
            vmem_limit_bytes=_VMEM_LIMIT_BYTES),
        cost_estimate=pl.CostEstimate(
            flops=int(B * C * HW),
            transcendentals=0,
            bytes_accessed=int(2 * B * C * HW * itemsize + B * C * 4)),
    )(scale, x)

    return out.reshape(B, C, H, W)


def ca_reference(x_nchw, fc1_w, fc1_b, fc2_w, fc2_b):
    """Pure-JAX reference mirroring the PyTorch forward."""
    pooled = jnp.mean(x_nchw.astype(jnp.float32), axis=(2, 3))            # (B, C)
    h = jnp.maximum(pooled @ fc1_w.astype(jnp.float32).T + fc1_b, 0.0)    # (B, Cr)
    s = jax.nn.sigmoid(h @ fc2_w.astype(jnp.float32).T + fc2_b)           # (B, C)
    return x_nchw * s[:, :, None, None].astype(x_nchw.dtype)


if __name__ == "__main__":
    def make_inputs(key, B, C, H, W, reduction=4):
        Cr = max(1, C // reduction)
        kx, k1, k2, k3, k4 = jax.random.split(key, 5)
        x = jax.random.normal(kx, (B, C, H, W), dtype=jnp.float32)
        fc1_w = jax.random.normal(k1, (Cr, C), dtype=jnp.float32) * 0.1
        fc1_b = jax.random.normal(k2, (Cr,), dtype=jnp.float32) * 0.1
        fc2_w = jax.random.normal(k3, (C, Cr), dtype=jnp.float32) * 0.1
        fc2_b = jax.random.normal(k4, (C,), dtype=jnp.float32) * 0.1
        return x, fc1_w, fc1_b, fc2_w, fc2_b

    # Module defaults: channels=64, reduction=4.  Three cases exercise:
    #  (1) fused single-pass path (default 16x16 map),
    #  (2) forced two-pass path with 128-tiling, tail masking (HW=225) and
    #      2-way parallel chunks,
    #  (3) fused path with B=1 and HW<128 (7x7 map).
    cases = [
        ((2, 64, 16, 16), {}),
        ((2, 64, 15, 15), dict(fuse_threshold_bytes=0,
                               target_block_bytes=128 * 64 * 4)),
        ((1, 64, 7, 7), {}),
    ]

    keys = jax.random.split(jax.random.PRNGKey(0), len(cases))
    for (shape, kw), k in zip(cases, keys):
        x, w1, b1, w2, b2 = make_inputs(k, *shape)
        fn = jax.jit(functools.partial(ca_module, **kw))
        out = jax.block_until_ready(fn(x, w1, b1, w2, b2))
        ref = ca_reference(x, w1, b1, w2, b2)
        assert out.shape == x.shape
        err = float(jnp.max(jnp.abs(out - ref)))
        assert jnp.allclose(out, ref, atol=1e-5, rtol=1e-5), (
            f"shape {shape}: max err {err}")

    print("KERNEL_OK")
</pallas_src>

<mosaic_0001>
module attributes {stable_mosaic.version = 11 : i64} {
  func.func @_fused_kernel(%arg0: i32, %arg1: memref<1x64x256xf32, #tpu.memory_space<vmem>>, %arg2: memref<64x16xf32, #tpu.memory_space<vmem>>, %arg3: memref<1x16xf32, #tpu.memory_space<vmem>>, %arg4: memref<64x16xf32, #tpu.memory_space<vmem>>, %arg5: memref<64x1xf32, #tpu.memory_space<vmem>>, %arg6: memref<1x64x256xf32, #tpu.memory_space<vmem>>) attributes {dimension_semantics = [#tpu.dimension_semantics<parallel>], iteration_bounds = array<i64: 2>, scalar_prefetch = 0 : i64, scratch_operands = 0 : i64, tpu.core_type = #tpu.core_type<tc>, window_params = [{transform_indices = @transform_0, window_bounds = array<i64: 1, 64, 256>}, {pipeline_mode = #tpu.pipeline_mode<synchronous>, transform_indices = @transform_1, window_bounds = array<i64: 64, 16>}, {pipeline_mode = #tpu.pipeline_mode<synchronous>, transform_indices = @transform_2, window_bounds = array<i64: 1, 16>}, {pipeline_mode = #tpu.pipeline_mode<synchronous>, transform_indices = @transform_3, window_bounds = array<i64: 64, 16>}, {pipeline_mode = #tpu.pipeline_mode<synchronous>, transform_indices = @transform_4, window_bounds = array<i64: 64, 1>}, {transform_indices = @transform_5, window_bounds = array<i64: 1, 64, 256>}]} {
    %c0 = arith.constant 0 : index
    %c0_0 = arith.constant 0 : index
    %c0_1 = arith.constant 0 : index
    %0 = vector.load %arg1[%c0, %c0_0, %c0_1] : memref<1x64x256xf32, #tpu.memory_space<vmem>>, vector<1x64x256xf32>
    %1 = vector.shape_cast %0 : vector<1x64x256xf32> to vector<64x256xf32>
    %cst = arith.constant dense<0.000000e+00> : vector<64xf32>
    %2 = vector.multi_reduction <add>, %1, %cst [1] : vector<64x256xf32> to vector<64xf32>
    %3 = vector.shape_cast %2 : vector<64xf32> to vector<64x1xf32>
    %cst_2 = arith.constant 3.906250e-03 : f32
    %4 = vector.broadcast %cst_2 : f32 to vector<64x1xf32>
    %5 = arith.mulf %3, %4 : vector<64x1xf32>
    %c0_3 = arith.constant 0 : index
    %c0_4 = arith.constant 0 : index
    %6 = vector.load %arg2[%c0_3, %c0_4] : memref<64x16xf32, #tpu.memory_space<vmem>>, vector<64x16xf32>
    %c0_5 = arith.constant 0 : index
    %c0_6 = arith.constant 0 : index
    %7 = vector.load %arg3[%c0_5, %c0_6] : memref<1x16xf32, #tpu.memory_space<vmem>>, vector<1x16xf32>
    %c0_7 = arith.constant 0 : index
    %c0_8 = arith.constant 0 : index
    %8 = vector.load %arg4[%c0_7, %c0_8] : memref<64x16xf32, #tpu.memory_space<vmem>>, vector<64x16xf32>
    %c0_9 = arith.constant 0 : index
    %c0_10 = arith.constant 0 : index
    %9 = vector.load %arg5[%c0_9, %c0_10] : memref<64x1xf32, #tpu.memory_space<vmem>>, vector<64x1xf32>
    %10 = vector.broadcast %5 : vector<64x1xf32> to vector<64x16xf32>
    %11 = arith.mulf %6, %10 : vector<64x16xf32>
    %cst_11 = arith.constant dense<0.000000e+00> : vector<16xf32>
    %12 = vector.multi_reduction <add>, %11, %cst_11 [0] : vector<64x16xf32> to vector<16xf32>
    %13 = vector.shape_cast %12 : vector<16xf32> to vector<1x16xf32>
    %14 = arith.addf %13, %7 : vector<1x16xf32>
    %cst_12 = arith.constant 0.000000e+00 : f32
    %15 = vector.broadcast %cst_12 : f32 to vector<1x16xf32>
    %16 = arith.maximumf %14, %15 : vector<1x16xf32>
    %17 = vector.broadcast %16 : vector<1x16xf32> to vector<64x16xf32>
    %18 = arith.mulf %8, %17 : vector<64x16xf32>
    %cst_13 = arith.constant dense<0.000000e+00> : vector<64xf32>
    %19 = vector.multi_reduction <add>, %18, %cst_13 [1] : vector<64x16xf32> to vector<64xf32>
    %20 = vector.shape_cast %19 : vector<64xf32> to vector<64x1xf32>
    %21 = arith.addf %20, %9 : vector<64x1xf32>
    %22 = arith.negf %21 : vector<64x1xf32>
    %23 = math.exp %22 : vector<64x1xf32>
    %cst_14 = arith.constant 1.000000e+00 : f32
    %24 = vector.broadcast %cst_14 : f32 to vector<64x1xf32>
    %25 = arith.addf %24, %23 : vector<64x1xf32>
    %26 = arith.divf %24, %25 : vector<64x1xf32>
    %27 = vector.broadcast %26 : vector<64x1xf32> to vector<64x256xf32>
    %28 = arith.mulf %1, %27 : vector<64x256xf32>
    %c0_15 = arith.constant 0 : index
    %c0_16 = arith.constant 0 : index
    %c0_17 = arith.constant 0 : index
    %29 = vector.load %arg6[%c0_15, %c0_16, %c0_17] : memref<1x64x256xf32, #tpu.memory_space<vmem>>, vector<1x64x256xf32>
    %30 = vector.shape_cast %29 : vector<1x64x256xf32> to vector<64x256xf32>
    %31 = vector.shape_cast %28 : vector<64x256xf32> to vector<1x64x256xf32>
    tpu.vector_store %arg6[%c0_15, %c0_16, %c0_17], %31 {strides = array<i32>} : memref<1x64x256xf32, #tpu.memory_space<vmem>>, vector<1x64x256xf32>,
    return
  }
  func.func @transform_0(%arg0: i32) -> (i32, i32, i32) {
    %c0_i32 = arith.constant 0 : i32
    %c0_i32_0 = arith.constant 0 : i32
    %c0_i32_1 = arith.constant 0 : i32
    return %arg0, %c0_i32, %c0_i32_0 : i32, i32, i32
  }
  func.func @transform_1(%arg0: i32) -> (i32, i32) {
    %c0_i32 = arith.constant 0 : i32
    %c0_i32_0 = arith.constant 0 : i32
    %c0_i32_1 = arith.constant 0 : i32
    return %c0_i32, %c0_i32_0 : i32, i32
  }
  func.func @transform_2(%arg0: i32) -> (i32, i32) {
    %c0_i32 = arith.constant 0 : i32
    %c0_i32_0 = arith.constant 0 : i32
    %c0_i32_1 = arith.constant 0 : i32
    return %c0_i32, %c0_i32_0 : i32, i32
  }
  func.func @transform_3(%arg0: i32) -> (i32, i32) {
    %c0_i32 = arith.constant 0 : i32
    %c0_i32_0 = arith.constant 0 : i32
    %c0_i32_1 = arith.constant 0 : i32
    return %c0_i32, %c0_i32_0 : i32, i32
  }
  func.func @transform_4(%arg0: i32) -> (i32, i32) {
    %c0_i32 = arith.constant 0 : i32
    %c0_i32_0 = arith.constant 0 : i32
    %c0_i32_1 = arith.constant 0 : i32
    return %c0_i32, %c0_i32_0 : i32, i32
  }
  func.func @transform_5(%arg0: i32) -> (i32, i32, i32) {
    %c0_i32 = arith.constant 0 : i32
    %c0_i32_0 = arith.constant 0 : i32
    %c0_i32_1 = arith.constant 0 : i32
    return %arg0, %c0_i32, %c0_i32_0 : i32, i32, i32
  }
}

</mosaic_0001>

<llo_original>
// kernel: ca_module.1
$region0: #{ca_module.1}
  #allocation0 [shape = 'u32[]', space=smem, size = 0x4, offset = 0x4, fixed_abs, tag = 'smem constant byte address 0x4 - core index']
  #allocation1 [shape = 'u32[72,128]{1,0:T(1,128)}', space=vmem, size = 0x9000, scoped, tag = 'internal scratch']
  %s0 = inlined_call_operand.vmem [shape: f32[2,64,256], index: 0, kind: input, shape index: {}]
  %s1 = inlined_call_operand.vmem [shape: f32[64,16], index: 1, kind: input, shape index: {}]
  %s2 = inlined_call_operand.vmem [shape: f32[1,16], index: 2, kind: input, shape index: {}]
  %s3 = inlined_call_operand.vmem [shape: f32[64,16], index: 3, kind: input, shape index: {}]
  %s4 = inlined_call_operand.vmem [shape: f32[64,1], index: 4, kind: input, shape index: {}]
  %s5 = inlined_call_operand.vmem [shape: f32[2,64,256], index: 5, kind: output, shape index: {}]
  %s6 = sld [smem:[#allocation0]]
  $region53: #{ca_module.1} parent=0
    _
  %s8 = ssub.s32 1, %s6
  %s9 = scalar_select 0, %s8, %s6
  loop: start=0, step=1, limit=4
  $region2: #{ca_module.1} parent=0 // loop_pre_header
    _
  $region3: #{ca_module.1} parent=0 // loop_header
    %s11 = sphi 0, %s15
    %p12 = scmp.ge.s32.totalorder %s11, 4
    %s21 = sphi 0, %s23
    %s24 = sphi 0, %s21
    %s25 = sphi 0, %s24
    %s41 = sphi 0, %s25
    %s45 = sphi 0, %s45
    %s47 = sphi 0, %s45
    %s48 = sphi 0, %s47
    %s62 = sphi 0, %s48
    %s66 = sphi 0, %s66
    %s68 = sphi 0, %s66
    %s69 = sphi 0, %s68
    %s83 = sphi 0, %s69
    %s87 = sphi 0, %s87
    %s89 = sphi 0, %s87
    %s90 = sphi 0, %s89
    %s104 = sphi 0, %s90
    %s108 = sphi 0, %s108
    %s110 = sphi 0, %s108
    %s111 = sphi 0, %s110
    %s125 = sphi 0, %s111
    %s131 = sphi 0, %s133
    %s134 = sphi 0, %s131
    %s135 = sphi 0, %s134
    %s151 = sphi 0, %s135
  $region4: #{ca_module.1} parent=0 // loop_header_branch
    %14 = sbr.rel (%p12) target = $region8
  $region5: #{ca_module.1} parent=0 // loop_body
    %s16 = ssub.s32 %s11, 1
    %s17 = ssub.s32 %s11, 2
    %s18 = sadd.s32 %s11, 1
    %s19 = ssub.s32 %s11, %s18
    %p20 = scmp.eq.s32.totalorder %s19, 0
    %s22 = sadd.s32 %s21, 1
    %s23 = scalar_select %p20, %s21, %s22
    %p26 = pneg %p20
    %p27 = scmp.eq.s32.totalorder %s11, 1
    %p28 = por %p26, %p27
    %p29 = scmp.ne.s32.totalorder %s21, %s24
    %p30 = scmp.eq.s32.totalorder %s11, 0
    %p31 = por %p29, %p30
    %p32 = scmp.ne.s32.totalorder %s21, %s24
    %p33 = scmp.eq.s32.totalorder %s16, 1
    %p34 = por %p32, %p33
    %p35 = scmp.ne.s32.totalorder %s24, %s25
    %p36 = scmp.eq.s32.totalorder %s16, 0
    %p37 = por %p35, %p36
    %p38 = scmp.ne.s32.totalorder %s24, %s25
    %p39 = scmp.eq.s32.totalorder %s17, 1
    %p40 = por %p38, %p39
    %p42 = scmp.ne.s32.totalorder %s25, %s41
    %p43 = scmp.eq.s32.totalorder %s17, 0
    %p44 = por %p42, %p43
    %s46 = sadd.s32 %s45, 1
    %p49 = scmp.eq.s32.totalorder %s11, 1
    %p50 = scmp.ne.s32.totalorder %s45, %s47
    %p51 = scmp.eq.s32.totalorder %s11, 0
    %p52 = por %p50, %p51
    %p53 = scmp.ne.s32.totalorder %s45, %s47
    %p54 = scmp.eq.s32.totalorder %s16, 1
    %p55 = por %p53, %p54
    %p56 = scmp.ne.s32.totalorder %s47, %s48
    %p57 = scmp.eq.s32.totalorder %s16, 0
    %p58 = por %p56, %p57
    %p59 = scmp.ne.s32.totalorder %s47, %s48
    %p60 = scmp.eq.s32.totalorder %s17, 1
    %p61 = por %p59, %p60
    %p63 = scmp.ne.s32.totalorder %s48, %s62
    %p64 = scmp.eq.s32.totalorder %s17, 0
    %p65 = por %p63, %p64
    %s67 = sadd.s32 %s66, 1
    %p70 = scmp.eq.s32.totalorder %s11, 1
    %p71 = scmp.ne.s32.totalorder %s66, %s68
    %p72 = scmp.eq.s32.totalorder %s11, 0
    %p73 = por %p71, %p72
    %p74 = scmp.ne.s32.totalorder %s66, %s68
    %p75 = scmp.eq.s32.totalorder %s16, 1
    %p76 = por %p74, %p75
    %p77 = scmp.ne.s32.totalorder %s68, %s69
    %p78 = scmp.eq.s32.totalorder %s16, 0
    %p79 = por %p77, %p78
    %p80 = scmp.ne.s32.totalorder %s68, %s69
    %p81 = scmp.eq.s32.totalorder %s17, 1
    %p82 = por %p80, %p81
    %p84 = scmp.ne.s32.totalorder %s69, %s83
    %p85 = scmp.eq.s32.totalorder %s17, 0
    %p86 = por %p84, %p85
    %s88 = sadd.s32 %s87, 1
    %p91 = scmp.eq.s32.totalorder %s11, 1
    %p92 = scmp.ne.s32.totalorder %s87, %s89
    %p93 = scmp.eq.s32.totalorder %s11, 0
    %p94 = por %p92, %p93
    %p95 = scmp.ne.s32.totalorder %s87, %s89
    %p96 = scmp.eq.s32.totalorder %s16, 1
    %p97 = por %p95, %p96
    %p98 = scmp.ne.s32.totalorder %s89, %s90
    %p99 = scmp.eq.s32.totalorder %s16, 0
    %p100 = por %p98, %p99
    %p101 = scmp.ne.s32.totalorder %s89, %s90
    %p102 = scmp.eq.s32.totalorder %s17, 1
    %p103 = por %p101, %p102
    %p105 = scmp.ne.s32.totalorder %s90, %s104
    %p106 = scmp.eq.s32.totalorder %s17, 0
    %p107 = por %p105, %p106
    %s109 = sadd.s32 %s108, 1
    %p112 = scmp.eq.s32.totalorder %s11, 1
    %p113 = scmp.ne.s32.totalorder %s108, %s110
    %p114 = scmp.eq.s32.totalorder %s11, 0
    %p115 = por %p113, %p114
    %p116 = scmp.ne.s32.totalorder %s108, %s110
    %p117 = scmp.eq.s32.totalorder %s16, 1
    %p118 = por %p116, %p117
    %p119 = scmp.ne.s32.totalorder %s110, %s111
    %p120 = scmp.eq.s32.totalorder %s16, 0
    %p121 = por %p119, %p120
    %p122 = scmp.ne.s32.totalorder %s110, %s111
    %p123 = scmp.eq.s32.totalorder %s17, 1
    %p124 = por %p122, %p123
    %p126 = scmp.ne.s32.totalorder %s111, %s125
    %p127 = scmp.eq.s32.totalorder %s17, 0
    %p128 = por %p126, %p127
    %s129 = ssub.s32 %s11, %s18
    %p130 = scmp.eq.s32.totalorder %s129, 0
    %s132 = sadd.s32 %s131, 1
    %s133 = scalar_select %p130, %s131, %s132
    %p136 = pneg %p130
    %p137 = scmp.eq.s32.totalorder %s11, 1
    %p138 = por %p136, %p137
    %p139 = scmp.ne.s32.totalorder %s131, %s134
    %p140 = scmp.eq.s32.totalorder %s11, 0
    %p141 = por %p139, %p140
    %p142 = scmp.ne.s32.totalorder %s131, %s134
    %p143 = scmp.eq.s32.totalorder %s16, 1
    %p144 = por %p142, %p143
    %p145 = scmp.ne.s32.totalorder %s134, %s135
    %p146 = scmp.eq.s32.totalorder %s16, 0
    %p147 = por %p145, %p146
    %p148 = scmp.ne.s32.totalorder %s134, %s135
    %p149 = scmp.eq.s32.totalorder %s17, 1
    %p150 = por %p148, %p149
    %p152 = scmp.ne.s32.totalorder %s135, %s151
    %p153 = scmp.eq.s32.totalorder %s17, 0
    %p154 = por %p152, %p153
    %p155 = scmp.le.s32.totalorder 1, %s11
    %p156 = scmp.lt.s32.totalorder %s11, 3
    %p157 = pnand %p155, %p156
    %p158 = pneg %p157
    // Predicated region
    $region9: #{ca_module.1} parent=5 // pred_check
      _
    $region10: #{ca_module.1} parent=5 // pred_check_branch
      %160 = sbr.rel (%p157) target = $region12
    $region11: #{ca_module.1} parent=5 // pred_region
      %s161 = ssub.s32 %s11, 1
      // Predicated region
      $region13: #{ca_module.1} parent=11 // pred_check
        %p162 = pneg %p58
      $region14: #{ca_module.1} parent=11 // pred_check_branch
        %164 = sbr.rel (%p162) target = $region16
      $region15: #{ca_module.1} parent=11 // pred_region
        _
      $region16: #{ca_module.1} parent=11 // pred_fallthru
        _
      // Predicated region
      $region17: #{ca_module.1} parent=11 // pred_check
        %p165 = pneg %p79
      $region18: #{ca_module.1} parent=11 // pred_check_branch
        %167 = sbr.rel (%p165) target = $region20
      $region19: #{ca_module.1} parent=11 // pred_region
        _
      $region20: #{ca_module.1} parent=11 // pred_fallthru
        _
      // Predicated region
      $region21: #{ca_module.1} parent=11 // pred_check
        %p168 = pneg %p100
      $region22: #{ca_module.1} parent=11 // pred_check_branch
        %170 = sbr.rel (%p168) target = $region24
      $region23: #{ca_module.1} parent=11 // pred_region
        _
      $region24: #{ca_module.1} parent=11 // pred_fallthru
        _
      // Predicated region
      $region25: #{ca_module.1} parent=11 // pred_check
        %p171 = pneg %p121
      $region26: #{ca_module.1} parent=11 // pred_check_branch
        %173 = sbr.rel (%p171) target = $region28
      $region27: #{ca_module.1} parent=11 // pred_region
        _
      $region28: #{ca_module.1} parent=11 // pred_fallthru
        _
    $region12: #{ca_module.1} parent=5 // pred_fallthru
      _
    %p174 = scmp.lt.s32.totalorder %s11, 2
    // Predicated region
    $region29: #{ca_module.1} parent=5 // pred_check
      %p175 = pneg %p174
    $region30: #{ca_module.1} parent=5 // pred_check_branch
      %177 = sbr.rel (%p175) target = $region32
    $region31: #{ca_module.1} parent=5 // pred_region
      // Predicated region
      $region33: #{ca_module.1} parent=31 // pred_check
        %p178 = pneg %p31
      $region34: #{ca_module.1} parent=31 // pred_check_branch
        %180 = sbr.rel (%p178) target = $region36
      $region35: #{ca_module.1} parent=31 // pred_region
        %p181 = scmp.lt.s32.totalorder %s11, 1
        %s182 = scalar_select %p181, %s11, 1
        %s183 = smul.addr %s182, 16
        %s184 = smul.addr %s183, 8
        %s185 = scalar_lea.vmem %s0, %s184
      $region36: #{ca_module.1} parent=31 // pred_fallthru
        _
    $region32: #{ca_module.1} parent=5 // pred_fallthru
      _
    %p186 = scmp.le.s32.totalorder 1, %s11
    %p187 = scmp.lt.s32.totalorder %s11, 3
    %p188 = pnand %p186, %p187
    %p189 = pneg %p188
    // Predicated region
    $region37: #{ca_module.1} parent=5 // pred_check
      _
    $region38: #{ca_module.1} parent=5 // pred_check_branch
      %191 = sbr.rel (%p188) target = $region40
    $region39: #{ca_module.1} parent=5 // pred_region
      %s192 = ssub.s32 %s11, 1
      %p193 = scmp.lt.s32.totalorder %s16, 1
      %s194 = scalar_select %p193, %s16, 1
      %s195 = smul.addr %s194, 16
      %s196 = smul.addr %s195, 8
      %s197 = scalar_lea.vmem %s0, %s196
      %p198 = pneg %p37
      %p199 = pneg %p34
      %p200 = pneg %p58
      %p201 = pneg %p55
      %p202 = pneg %p79
      %p203 = pneg %p76
      %p204 = pneg %p100
      %p205 = pneg %p97
      %p206 = pneg %p121
      %p207 = pneg %p118
      %p208 = pneg %p147
      %p209 = pneg %p144
      %p210 = scmp.lt.s32.totalorder %s16, 1
      %s211 = scalar_select %p210, %s16, 1
      %s212 = smul.addr %s211, 16
      %s213 = smul.addr %s212, 8
      %s214 = scalar_lea.vmem %s5, %s213
      %p215 = scmp.lt.s32.totalorder %s16, 1
      %s216 = scalar_select %p215, %s16, 1
      %s217 = smul.addr %s216, 16
      %s218 = smul.addr %s217, 8
      %s219 = scalar_lea.vmem %s0, %s218
      %p220 = scmp.lt.s32.totalorder %s16, 1
      %s221 = scalar_select %p220, %s16, 1
      %s222 = smul.addr %s221, 16
      %s223 = smul.addr %s222, 8
      %s224 = scalar_lea.vmem %s5, %s223
      %v225 = vld [vmem:[%s219] sm:$0xff]
      %v226 = vld [vmem:[%s219 + $0x8] sm:$0xff]
      %v227 = vld [vmem:[%s219 + $0x10] sm:$0xff]
      %v228 = vld [vmem:[%s219 + $0x18] sm:$0xff]
      %v229 = vld [vmem:[%s219 + $0x20] sm:$0xff]
      %v230 = vld [vmem:[%s219 + $0x28] sm:$0xff]
      %v231 = vld [vmem:[%s219 + $0x30] sm:$0xff]
      %v232 = vld [vmem:[%s219 + $0x38] sm:$0xff]
      %v233 = vld [vmem:[%s219 + $0x40] sm:$0xff]
      %v234 = vld [vmem:[%s219 + $0x48] sm:$0xff]
      %v235 = vld [vmem:[%s219 + $0x50] sm:$0xff]
      %v236 = vld [vmem:[%s219 + $0x58] sm:$0xff]
      %v237 = vld [vmem:[%s219 + $0x60] sm:$0xff]
      %v238 = vld [vmem:[%s219 + $0x68] sm:$0xff]
      %v239 = vld [vmem:[%s219 + $0x70] sm:$0xff]
      %v240 = vld [vmem:[%s219 + $0x78] sm:$0xff]
      %v241 = vadd.f32 %v225, %v226
      %242 = vadd.xlane.f32.xlu0 %v241
      %v243 = vpop.xlane.xlu0 %242
      %v244 = vadd.f32 %v227, %v228
      %245 = vadd.xlane.f32.xlu0 %v244
      %v246 = vpop.xlane.xlu0 %245
      %v247 = vadd.f32 %v229, %v230
      %248 = vadd.xlane.f32.xlu0 %v247
      %v249 = vpop.xlane.xlu0 %248
      %v250 = vadd.f32 %v231, %v232
      %251 = vadd.xlane.f32.xlu0 %v250
      %v252 = vpop.xlane.xlu0 %251
      %v253 = vadd.f32 %v233, %v234
      %254 = vadd.xlane.f32.xlu0 %v253
      %v255 = vpop.xlane.xlu0 %254
      %v256 = vadd.f32 %v235, %v236
      %257 = vadd.xlane.f32.xlu0 %v256
      %v258 = vpop.xlane.xlu0 %257
      %v259 = vadd.f32 %v237, %v238
      %260 = vadd.xlane.f32.xlu0 %v259
      %v261 = vpop.xlane.xlu0 %260
      %v262 = vadd.f32 %v239, %v240
      %263 = vadd.xlane.f32.xlu0 %v262
      %v264 = vpop.xlane.xlu0 %263
      %v265 = vmul.f32 %v243, 0.00390625
      %v266 = vmul.f32 %v246, 0.00390625
      %v267 = vmul.f32 %v249, 0.00390625
      %v268 = vmul.f32 %v252, 0.00390625
      %v269 = vmul.f32 %v255, 0.00390625
      %v270 = vmul.f32 %v258, 0.00390625
      %v271 = vmul.f32 %v261, 0.00390625
      %v272 = vmul.f32 %v264, 0.00390625
      %v273 = vld [vmem:[%s1] sm:$0xff]
      %v274 = vld [vmem:[%s1 + $0x8] sm:$0xff]
      %v275 = vld [vmem:[%s1 + $0x10] sm:$0xff]
      %v276 = vld [vmem:[%s1 + $0x18] sm:$0xff]
      %v277 = vld [vmem:[%s1 + $0x20] sm:$0xff]
      %v278 = vld [vmem:[%s1 + $0x28] sm:$0xff]
      %v279 = vld [vmem:[%s1 + $0x30] sm:$0xff]
      %v280 = vld [vmem:[%s1 + $0x38] sm:$0xff]
      %v281 = vld [vmem:[%s2] sm:$0x1]
      %v282 = vld [vmem:[%s3] sm:$0xff]
      %v283 = vld [vmem:[%s3 + $0x8] sm:$0xff]
      %v284 = vld [vmem:[%s3 + $0x10] sm:$0xff]
      %v285 = vld [vmem:[%s3 + $0x18] sm:$0xff]
      %v286 = vld [vmem:[%s3 + $0x20] sm:$0xff]
      %v287 = vld [vmem:[%s3 + $0x28] sm:$0xff]
      %v288 = vld [vmem:[%s3 + $0x30] sm:$0xff]
      %v289 = vld [vmem:[%s3 + $0x38] sm:$0xff]
      %v290 = vld [vmem:[%s4] sm:$0xff]
      %v291 = vld [vmem:[%s4 + $0x8] sm:$0xff]
      %v292 = vld [vmem:[%s4 + $0x10] sm:$0xff]
      %v293 = vld [vmem:[%s4 + $0x18] sm:$0xff]
      %v294 = vld [vmem:[%s4 + $0x20] sm:$0xff]
      %v295 = vld [vmem:[%s4 + $0x28] sm:$0xff]
      %v296 = vld [vmem:[%s4 + $0x30] sm:$0xff]
      %v297 = vld [vmem:[%s4 + $0x38] sm:$0xff]
      %v298 = vmul.f32 %v273, %v265
      %v299 = vmul.f32 %v274, %v266
      %v300 = vmul.f32 %v275, %v267
      %v301 = vmul.f32 %v276, %v268
      %v302 = vmul.f32 %v277, %v269
      %v303 = vmul.f32 %v278, %v270
      %v304 = vmul.f32 %v279, %v271
      %v305 = vmul.f32 %v280, %v272
      %vm306 = vcmask 130048
      %v307 = vsel %vm306, %v298, 0.0
      %v308 = vsel %vm306, %v299, 0.0
      %v309 = vadd.f32 %v307, %v308
      %v310 = vsel %vm306, %v300, 0.0
      %v311 = vadd.f32 %v309, %v310
      %v312 = vsel %vm306, %v301, 0.0
      %v313 = vadd.f32 %v311, %v312
      %v314 = vsel %vm306, %v302, 0.0
      %v315 = vadd.f32 %v313, %v314
      %v316 = vsel %vm306, %v303, 0.0
      %v317 = vadd.f32 %v315, %v316
      %v318 = vsel %vm306, %v304, 0.0
      %v319 = vadd.f32 %v317, %v318
      %v320 = vsel %vm306, %v305, 0.0
      %v321 = vadd.f32 %v319, %v320
      %v322 = vrot.slane %v321, 4
      %v323 = vadd.f32 %v321, %v322
      %v324 = vrot.slane %v323, 2
      %v325 = vadd.f32 %v323, %v324
      %v326 = vrot.slane %v325, 1
      %v327 = vadd.f32 %v325, %v326
      %v328 = vadd.f32 %v327, %v281
      %v329 = vmax.f32 %v328, 0.0
      %v330 = vperm.slane %v329, 0
      %v331 = vmul.f32 %v282, %v330
      %v332 = vmul.f32 %v283, %v330
      %v333 = vmul.f32 %v284, %v330
      %v334 = vmul.f32 %v285, %v330
      %v335 = vmul.f32 %v286, %v330
      %v336 = vmul.f32 %v287, %v330
      %v337 = vmul.f32 %v288, %v330
      %v338 = vmul.f32 %v289, %v330
      %v339 = vsel %vm306, %v331, 0.0
      %340 = vadd.xlane.f32.xlu0 %v339
      %v341 = vpop.xlane.xlu0 %340
      %v342 = vsel %vm306, %v332, 0.0
      %343 = vadd.xlane.f32.xlu0 %v342
      %v344 = vpop.xlane.xlu0 %343
      %v345 = vsel %vm306, %v333, 0.0
      %346 = vadd.xlane.f32.xlu0 %v345
      %v347 = vpop.xlane.xlu0 %346
      %v348 = vsel %vm306, %v334, 0.0
      %349 = vadd.xlane.f32.xlu0 %v348
      %v350 = vpop.xlane.xlu0 %349
      %v351 = vsel %vm306, %v335, 0.0
      %352 = vadd.xlane.f32.xlu0 %v351
      %v353 = vpop.xlane.xlu0 %352
      %v354 = vsel %vm306, %v336, 0.0
      %355 = vadd.xlane.f32.xlu0 %v354
      %v356 = vpop.xlane.xlu0 %355
      %v357 = vsel %vm306, %v337, 0.0
      %358 = vadd.xlane.f32.xlu0 %v357
      %v359 = vpop.xlane.xlu0 %358
      %v360 = vsel %vm306, %v338, 0.0
      %361 = vadd.xlane.f32.xlu0 %v360
      %v362 = vpop.xlane.xlu0 %361
      %v363 = vadd.f32 %v341, %v290
      %v364 = vadd.f32 %v344, %v291
      %v365 = vadd.f32 %v347, %v292
      %v366 = vadd.f32 %v350, %v293
      %v367 = vadd.f32 %v353, %v294
      %v368 = vadd.f32 %v356, %v295
      %v369 = vadd.f32 %v359, %v296
      %v370 = vadd.f32 %v362, %v297
      %v371 = vxor.u32 %v363, 2147483648
      %v372 = vxor.u32 %v364, 2147483648
      %v373 = vxor.u32 %v365, 2147483648
      %v374 = vxor.u32 %v366, 2147483648
      %v375 = vxor.u32 %v367, 2147483648
      %v376 = vxor.u32 %v368, 2147483648
      %v377 = vxor.u32 %v369, 2147483648
      %v378 = vxor.u32 %v370, 2147483648
      %v379 = vmul.f32 %v371, 1.442695
      %v380 = vpow.pop %v379
      %v381 = vmul.f32 %v372, 1.442695
      %v382 = vpow.pop %v381
      %v383 = vmul.f32 %v373, 1.442695
      %v384 = vpow.pop %v383
      %v385 = vmul.f32 %v374, 1.442695
      %v386 = vpow.pop %v385
      %v387 = vmul.f32 %v375, 1.442695
      %v388 = vpow.pop %v387
      %v389 = vmul.f32 %v376, 1.442695
      %v390 = vpow.pop %v389
      %v391 = vmul.f32 %v377, 1.442695
      %v392 = vpow.pop %v391
      %v393 = vmul.f32 %v378, 1.442695
      %v394 = vpow.pop %v393
      %v395 = vadd.f32 %v380, 1.0
      %v396 = vadd.f32 %v382, 1.0
      %v397 = vadd.f32 %v384, 1.0
      %v398 = vadd.f32 %v386, 1.0
      %v399 = vadd.f32 %v388, 1.0
      %v400 = vadd.f32 %v390, 1.0
      %v401 = vadd.f32 %v392, 1.0
      %v402 = vadd.f32 %v394, 1.0
      %v403 = vrcp.pop %v395
      %v404 = vmul.f32 %v395, %v403
      %v405 = vsub.f32 1.0, %v404
      %v406 = vmul.f32 %v403, %v405
      %v407 = vadd.f32 %v403, %v406
      %vm408 = vweird.f32 %v395
      %vm409 = vweird.f32 %v403
      %vm410 = vmor %vm408, %vm409
      %v411 = vsel %vm410, %v403, %v407
      %v412 = vand.u32 2147483647, %v395
      %vm413 = vcmp.eq.f32.partialorder %v412, 8.507059e+37
      %v414 = vand.u32 %v395, 2147483648
      %v415 = vor.u32 1.1754944e-38, %v414
      %v416 = vsel %vm413, %v415, %v411
      %v417 = vmul.f32 1.0, %v416
      %v418 = vrcp.pop %v396
      %v419 = vmul.f32 %v396, %v418
      %v420 = vsub.f32 1.0, %v419
      %v421 = vmul.f32 %v418, %v420
      %v422 = vadd.f32 %v418, %v421
      %vm423 = vweird.f32 %v396
      %vm424 = vweird.f32 %v418
      %vm425 = vmor %vm423, %vm424
      %v426 = vsel %vm425, %v418, %v422
      %v427 = vand.u32 2147483647, %v396
      %vm428 = vcmp.eq.f32.partialorder %v427, 8.507059e+37
      %v429 = vand.u32 %v396, 2147483648
      %v430 = vor.u32 1.1754944e-38, %v429
      %v431 = vsel %vm428, %v430, %v426
      %v432 = vmul.f32 1.0, %v431
      %v433 = vrcp.pop %v397
      %v434 = vmul.f32 %v397, %v433
      %v435 = vsub.f32 1.0, %v434
      %v436 = vmul.f32 %v433, %v435
      %v437 = vadd.f32 %v433, %v436
      %vm438 = vweird.f32 %v397
      %vm439 = vweird.f32 %v433
      %vm440 = vmor %vm438, %vm439
      %v441 = vsel %vm440, %v433, %v437
      %v442 = vand.u32 2147483647, %v397
      %vm443 = vcmp.eq.f32.partialorder %v442, 8.507059e+37
      %v444 = vand.u32 %v397, 2147483648
      %v445 = vor.u32 1.1754944e-38, %v444
      %v446 = vsel %vm443, %v445, %v441
      %v447 = vmul.f32 1.0, %v446
      %v448 = vrcp.pop %v398
      %v449 = vmul.f32 %v398, %v448
      %v450 = vsub.f32 1.0, %v449
      %v451 = vmul.f32 %v448, %v450
      %v452 = vadd.f32 %v448, %v451
      %vm453 = vweird.f32 %v398
      %vm454 = vweird.f32 %v448
      %vm455 = vmor %vm453, %vm454
      %v456 = vsel %vm455, %v448, %v452
      %v457 = vand.u32 2147483647, %v398
      %vm458 = vcmp.eq.f32.partialorder %v457, 8.507059e+37
      %v459 = vand.u32 %v398, 2147483648
      %v460 = vor.u32 1.1754944e-38, %v459
      %v461 = vsel %vm458, %v460, %v456
      %v462 = vmul.f32 1.0, %v461
      %v463 = vrcp.pop %v399
      %v464 = vmul.f32 %v399, %v463
      %v465 = vsub.f32 1.0, %v464
      %v466 = vmul.f32 %v463, %v465
      %v467 = vadd.f32 %v463, %v466
      %vm468 = vweird.f32 %v399
      %vm469 = vweird.f32 %v463
      %vm470 = vmor %vm468, %vm469
      %v471 = vsel %vm470, %v463, %v467
      %v472 = vand.u32 2147483647, %v399
      %vm473 = vcmp.eq.f32.partialorder %v472, 8.507059e+37
      %v474 = vand.u32 %v399, 2147483648
      %v475 = vor.u32 1.1754944e-38, %v474
      %v476 = vsel %vm473, %v475, %v471
      %v477 = vmul.f32 1.0, %v476
      %v478 = vrcp.pop %v400
      %v479 = vmul.f32 %v400, %v478
      %v480 = vsub.f32 1.0, %v479
      %v481 = vmul.f32 %v478, %v480
      %v482 = vadd.f32 %v478, %v481
      %vm483 = vweird.f32 %v400
      %vm484 = vweird.f32 %v478
      %vm485 = vmor %vm483, %vm484
      %v486 = vsel %vm485, %v478, %v482
      %v487 = vand.u32 2147483647, %v400
      %vm488 = vcmp.eq.f32.partialorder %v487, 8.507059e+37
      %v489 = vand.u32 %v400, 2147483648
      %v490 = vor.u32 1.1754944e-38, %v489
      %v491 = vsel %vm488, %v490, %v486
      %v492 = vmul.f32 1.0, %v491
      %v493 = vrcp.pop %v401
      %v494 = vmul.f32 %v401, %v493
      %v495 = vsub.f32 1.0, %v494
      %v496 = vmul.f32 %v493, %v495
      %v497 = vadd.f32 %v493, %v496
      %vm498 = vweird.f32 %v401
      %vm499 = vweird.f32 %v493
      %vm500 = vmor %vm498, %vm499
      %v501 = vsel %vm500, %v493, %v497
      %v502 = vand.u32 2147483647, %v401
      %vm503 = vcmp.eq.f32.partialorder %v502, 8.507059e+37
      %v504 = vand.u32 %v401, 2147483648
      %v505 = vor.u32 1.1754944e-38, %v504
      %v506 = vsel %vm503, %v505, %v501
      %v507 = vmul.f32 1.0, %v506
      %v508 = vrcp.pop %v402
      %v509 = vmul.f32 %v402, %v508
      %v510 = vsub.f32 1.0, %v509
      %v511 = vmul.f32 %v508, %v510
      %v512 = vadd.f32 %v508, %v511
      %vm513 = vweird.f32 %v402
      %vm514 = vweird.f32 %v508
      %vm515 = vmor %vm513, %vm514
      %v516 = vsel %vm515, %v508, %v512
      %v517 = vand.u32 2147483647, %v402
      %vm518 = vcmp.eq.f32.partialorder %v517, 8.507059e+37
      %v519 = vand.u32 %v402, 2147483648
      %v520 = vor.u32 1.1754944e-38, %v519
      %v521 = vsel %vm518, %v520, %v516
      %v522 = vmul.f32 1.0, %v521
      %524 = vset.pattern.permute.xlu0 0
      %525 = vperm.xlu0 %524, %v417
      %v526 = vpop.permute.xlu0 %525
      %529 = vset.pattern.permute.xlu0 0
      %530 = vperm.xlu0 %529, %v432
      %v531 = vpop.permute.xlu0 %530
      %534 = vset.pattern.permute.xlu0 0
      %535 = vperm.xlu0 %534, %v447
      %v536 = vpop.permute.xlu0 %535
      %539 = vset.pattern.permute.xlu0 0
      %540 = vperm.xlu0 %539, %v462
      %v541 = vpop.permute.xlu0 %540
      %544 = vset.pattern.permute.xlu0 0
      %545 = vperm.xlu0 %544, %v477
      %v546 = vpop.permute.xlu0 %545
      %549 = vset.pattern.permute.xlu0 0
      %550 = vperm.xlu0 %549, %v492
      %v551 = vpop.permute.xlu0 %550
      %554 = vset.pattern.permute.xlu0 0
      %555 = vperm.xlu0 %554, %v507
      %v556 = vpop.permute.xlu0 %555
      %559 = vset.pattern.permute.xlu0 0
      %560 = vperm.xlu0 %559, %v522
      %v561 = vpop.permute.xlu0 %560
      %v563 = vmul.f32 %v225, %v526
      %v564 = vmul.f32 %v226, %v526
      %v565 = vmul.f32 %v227, %v531
      %v566 = vmul.f32 %v228, %v531
      %v567 = vmul.f32 %v229, %v536
      %v568 = vmul.f32 %v230, %v536
      %v569 = vmul.f32 %v231, %v541
      %v570 = vmul.f32 %v232, %v541
      %v571 = vmul.f32 %v233, %v546
      %v572 = vmul.f32 %v234, %v546
      %v573 = vmul.f32 %v235, %v551
      %v574 = vmul.f32 %v236, %v551
      %v575 = vmul.f32 %v237, %v556
      %v576 = vmul.f32 %v238, %v556
      %v577 = vmul.f32 %v239, %v561
      %v578 = vmul.f32 %v240, %v561
      %579 = vst [vmem:[%s224] sm:$0xff] %v563
      %580 = vst [vmem:[%s224 + $0x8] sm:$0xff] %v564
      %581 = vst [vmem:[%s224 + $0x10] sm:$0xff] %v565
      %582 = vst [vmem:[%s224 + $0x18] sm:$0xff] %v566
      %583 = vst [vmem:[%s224 + $0x20] sm:$0xff] %v567
      %584 = vst [vmem:[%s224 + $0x28] sm:$0xff] %v568
      %585 = vst [vmem:[%s224 + $0x30] sm:$0xff] %v569
      %586 = vst [vmem:[%s224 + $0x38] sm:$0xff] %v570
      %587 = vst [vmem:[%s224 + $0x40] sm:$0xff] %v571
      %588 = vst [vmem:[%s224 + $0x48] sm:$0xff] %v572
      %589 = vst [vmem:[%s224 + $0x50] sm:$0xff] %v573
      %590 = vst [vmem:[%s224 + $0x58] sm:$0xff] %v574
      %591 = vst [vmem:[%s224 + $0x60] sm:$0xff] %v575
      %592 = vst [vmem:[%s224 + $0x68] sm:$0xff] %v576
      %593 = vst [vmem:[%s224 + $0x70] sm:$0xff] %v577
      %594 = vst [vmem:[%s224 + $0x78] sm:$0xff] %v578
      %p595 = scmp.lt.s32.totalorder %s16, 1
      %s596 = scalar_select %p595, %s16, 1
      %s597 = smul.addr %s596, 16
      %s598 = smul.addr %s597, 8
      %s599 = scalar_lea.vmem %s5, %s598
      // Predicated region
      $region41: #{ca_module.1} parent=39 // pred_check
        %p600 = pneg %p144
      $region42: #{ca_module.1} parent=39 // pred_check_branch
        %602 = sbr.rel (%p600) target = $region44
      $region43: #{ca_module.1} parent=39 // pred_region
        _
      $region44: #{ca_module.1} parent=39 // pred_fallthru
        _
    $region40: #{ca_module.1} parent=5 // pred_fallthru
      _
    %p603 = scmp.le.s32.totalorder 2, %s11
    // Predicated region
    $region45: #{ca_module.1} parent=5 // pred_check
      %p604 = pneg %p603
    $region46: #{ca_module.1} parent=5 // pred_check_branch
      %606 = sbr.rel (%p604) target = $region48
    $region47: #{ca_module.1} parent=5 // pred_region
      %s607 = ssub.s32 %s11, 2
      // Predicated region
      $region49: #{ca_module.1} parent=47 // pred_check
        %p608 = pneg %p150
      $region50: #{ca_module.1} parent=47 // pred_check_branch
        %610 = sbr.rel (%p608) target = $region52
      $region51: #{ca_module.1} parent=47 // pred_region
        %p611 = scmp.lt.s32.totalorder %s17, 1
        %s612 = scalar_select %p611, %s17, 1
        %s613 = smul.addr %s612, 16
        %s614 = smul.addr %s613, 8
        %s615 = scalar_lea.vmem %s5, %s614
      $region52: #{ca_module.1} parent=47 // pred_fallthru
        _
    $region48: #{ca_module.1} parent=5 // pred_fallthru
      _
  $region6: #{ca_module.1} parent=0 // loop_footer
    %s15 = sadd.s32 1, %s11
  $region7: #{ca_module.1} parent=0 // loop_footer_branch
    %10 = sbr.rel target = $region3
  $region8: #{ca_module.1} parent=0 // loop_exit
    _

</llo_original>
